<compile_context>
chip_gen: v7x
topology: tpu7x:2x2x1
jax: 0.10.0
libtpu: 0.0.40
codegen_flags: <defaults>
</compile_context>

<pallas_src>
import functools

import jax
import jax.numpy as jnp
from jax.experimental import pallas as pl
from jax.experimental.pallas import tpu as pltpu


def basic_block_kernel(x_ref, wb1_ref, wb2_ref, s1_ref, b1_ref, s2_ref, b2_ref,
                       out_ref, *, H):
    # x_ref   : (M, WC) bf16   -- M = B_TILE*H rows of merged (W*C) lanes
    # wb*_ref : (3*WC, WC) bf16 -- K-stacked banded conv weights (ky = 0,1,2)
    # s*/b*   : (1, WC) f32     -- folded BatchNorm scale / bias (tiled over W)
    # out_ref : (M, WC) bf16
    M, WC = x_ref.shape

    # Row index within each image (batch is folded along the M/sublane axis).
    # Computed once, reused by both convs.
    row = jax.lax.broadcasted_iota(jnp.int32, (M, WC), 0) % H
    mask_dn = row >= 1          # row y-1 exists inside this image
    mask_up = row <= H - 2      # row y+1 exists inside this image

    def lhs_3tap(v_f32):
        # Build the (M, 3*WC) LHS for the K-fused conv matmul: input rows
        # shifted by +1 / 0 / -1 in H (zeroed at image edges so the shift never
        # leaks across images in the folded batch), concatenated along lanes
        # at 128-multiple boundaries, cast once to bf16 for the MXU.
        dn = jnp.where(mask_dn, pltpu.roll(v_f32, shift=1, axis=0), 0.0)
        up = jnp.where(mask_up, pltpu.roll(v_f32, shift=M - 1, axis=0), 0.0)
        return jnp.concatenate([dn, v_f32, up], axis=-1).astype(jnp.bfloat16)

    x = x_ref[...].astype(jnp.float32)          # (M, WC); reused for the residual

    # conv1 -> bn1 (folded) -> relu        (single MXU push, K = 3*WC)
    y1 = jnp.dot(lhs_3tap(x), wb1_ref[...], preferred_element_type=jnp.float32)
    y1 = jnp.maximum(y1 * s1_ref[0] + b1_ref[0], 0.0)

    # conv2 -> bn2 (folded) -> + residual -> relu
    y2 = jnp.dot(lhs_3tap(y1), wb2_ref[...], preferred_element_type=jnp.float32)
    y2 = y2 * s2_ref[0] + b2_ref[0] + x
    out_ref[...] = jnp.maximum(y2, 0.0).astype(out_ref.dtype)


def band_weights(w_oihw, W):
    """PyTorch (Cout, Cin, 3, 3) conv weight -> (3*W*Cin, W*Cout) K-stacked bands.

    band_ky[xi*Cin + ci, xo*Cout + co] = w[co, ci, ky, xi - xo + 1] when
    |xi - xo| <= 1 (0 otherwise), so a row-of-pixels vector (W*Cin,) @ band_ky
    applies all three kx taps from image row (y + ky - 1) with the W-boundary
    zero padding built into the band structure.  The three bands are stacked
    along the contraction (K) axis so one matmul applies the whole 3x3 stencil.
    """
    Cout, Cin, KH, KW = w_oihw.shape
    assert (KH, KW) == (3, 3), "band_weights assumes a 3x3 kernel"
    w_t = jnp.transpose(w_oihw, (2, 3, 1, 0)).astype(jnp.float32)  # (ky, kx, Cin, Cout)
    bands = []
    for ky in range(KH):
        mat = jnp.zeros((W * Cin, W * Cout), jnp.float32)
        for kx in range(KW):
            # shift[xi, xo] = 1  iff  xi = xo + kx - 1
            shift = jnp.eye(W, W, k=1 - kx, dtype=jnp.float32)
            mat = mat + jnp.kron(shift, w_t[ky, kx])
        bands.append(mat)
    return jnp.concatenate(bands, axis=0)      # (3*W*Cin, W*Cout)


def pick_batch_tile(N, H, max_m=256):
    """Largest divisor of N such that B_TILE*H <= max_m (vreg-pressure cap)."""
    best = 1
    for bt in range(1, N + 1):
        if N % bt == 0 and bt * H <= max_m:
            best = bt
    return best


def basic_block_forward(x_nchw, w1, w2, bn1, bn2, eps=1e-5):
    """x_nchw: (N, C, H, W); w1/w2: (C, C, 3, 3) PyTorch conv weights;
    bn1/bn2: dicts with gamma, beta, mean, var (each shape (C,))."""
    N, C, H, W = x_nchw.shape
    WC = W * C
    assert WC % 128 == 0, "merged W*C lane width must be a multiple of 128"
    assert H % 8 == 0, "H must be sublane-aligned in this merged layout"
    assert w1.shape == (C, C, 3, 3) and w2.shape == (C, C, 3, 3), \
        "stride=1 / no-downsample BasicBlock requires Cin == Cout 3x3 convs"

    B_TILE = pick_batch_tile(N, H)
    M = B_TILE * H
    grid = (N // B_TILE,)

    # Single boundary relayout NCHW -> (N*H, W*C), cast to bf16 for the MXU.
    # (In an NHWC-native pipeline this transpose disappears; keep activations
    #  in this layout across consecutive blocks to avoid per-block relayouts.)
    x_m = jnp.transpose(x_nchw, (0, 2, 3, 1)).reshape(N * H, WC).astype(jnp.bfloat16)

    wb1 = band_weights(w1, W).astype(jnp.bfloat16)   # (3*WC, WC)
    wb2 = band_weights(w2, W).astype(jnp.bfloat16)

    def fold_bn(bn):
        scale = bn["gamma"] / jnp.sqrt(bn["var"] + eps)
        bias = bn["beta"] - bn["mean"] * scale
        return (jnp.tile(scale, W).reshape(1, WC).astype(jnp.float32),
                jnp.tile(bias, W).reshape(1, WC).astype(jnp.float32))

    s1, b1 = fold_bn(bn1)
    s2, b2 = fold_bn(bn2)

    const = lambda shape: pl.BlockSpec(shape, lambda n: (0,) * len(shape))

    out_m = pl.pallas_call(
        functools.partial(basic_block_kernel, H=H),
        out_shape=jax.ShapeDtypeStruct((N * H, WC), jnp.bfloat16),
        grid_spec=pltpu.PrefetchScalarGridSpec(
            num_scalar_prefetch=0,
            grid=grid,
            in_specs=[
                pl.BlockSpec((M, WC), lambda n: (n, 0)),
                const((3 * WC, WC)),
                const((3 * WC, WC)),
                const((1, WC)),
                const((1, WC)),
                const((1, WC)),
                const((1, WC)),
            ],
            out_specs=pl.BlockSpec((M, WC), lambda n: (n, 0)),
        ),
        compiler_params=pltpu.CompilerParams(
            dimension_semantics=("parallel",)),
    )(x_m, wb1, wb2, s1, b1, s2, b2)

    # Back to PyTorch NCHW / f32 output layout (transpose + cast fuse in XLA).
    return jnp.transpose(out_m.reshape(N, H, W, C), (0, 3, 1, 2)).astype(jnp.float32)


def reference_forward(x, w1, w2, bn1, bn2, eps=1e-5):
    """Pure-JAX reference (lax conv, f32) for a correctness check."""
    dn = jax.lax.conv_dimension_numbers(x.shape, w1.shape, ("NCHW", "OIHW", "NCHW"))

    def bn(y, p):
        scale = (p["gamma"] / jnp.sqrt(p["var"] + eps)).reshape(1, -1, 1, 1)
        bias = (p["beta"] - p["mean"] * p["gamma"] / jnp.sqrt(p["var"] + eps)).reshape(1, -1, 1, 1)
        return y * scale + bias

    out = jax.lax.conv_general_dilated(x, w1, (1, 1), ((1, 1), (1, 1)), dimension_numbers=dn)
    out = jnp.maximum(bn(out, bn1), 0.0)
    out = jax.lax.conv_general_dilated(out, w2, (1, 1), ((1, 1), (1, 1)), dimension_numbers=dn)
    out = bn(out, bn2) + x
    return jnp.maximum(out, 0.0)


if __name__ == "__main__":
    # Small shapes: batch=2, inplanes=planes=8, spatial=16 (stride=1, no downsample).
    N, C, H, W = 2, 8, 16, 16
    key = jax.random.PRNGKey(0)
    kx, kw1, kw2, kb1, kb2, km1, kv1, kg1, kg2 = jax.random.split(key, 9)

    x = jax.random.normal(kx, (N, C, H, W), jnp.float32)
    w1 = jax.random.normal(kw1, (C, C, 3, 3), jnp.float32) * 0.1
    w2 = jax.random.normal(kw2, (C, C, 3, 3), jnp.float32) * 0.1

    bn1 = dict(gamma=1.0 + 0.1 * jax.random.normal(kg1, (C,), jnp.float32),
               beta=0.1 * jax.random.normal(kb1, (C,), jnp.float32),
               mean=0.1 * jax.random.normal(km1, (C,), jnp.float32),
               var=jnp.abs(1.0 + 0.1 * jax.random.normal(kv1, (C,), jnp.float32)))
    bn2 = dict(gamma=1.0 + 0.1 * jax.random.normal(kg2, (C,), jnp.float32),
               beta=0.1 * jax.random.normal(kb2, (C,), jnp.float32),
               mean=jnp.zeros((C,), jnp.float32),
               var=jnp.ones((C,), jnp.float32))

    out = jax.block_until_ready(basic_block_forward(x, w1, w2, bn1, bn2))

    # Compare against the f32 reference evaluated on bf16-rounded operands
    # (the kernel feeds the MXU bf16 with f32 accumulation and stores bf16).
    rd = lambda a: a.astype(jnp.bfloat16).astype(jnp.float32)
    ref = jax.block_until_ready(reference_forward(rd(x), rd(w1), rd(w2), bn1, bn2))

    assert out.shape == (N, C, H, W)
    max_err = float(jnp.max(jnp.abs(out - ref)))
    assert jnp.allclose(out, ref, atol=4e-2, rtol=4e-2), \
        f"mismatch vs reference (max err {max_err})"

    print("KERNEL_OK")
</pallas_src>

<mosaic_0001>
module attributes {stable_mosaic.version = 11 : i64} {
  func.func @basic_block_kernel(%arg0: i32, %arg1: memref<32x128xbf16, #tpu.memory_space<vmem>>, %arg2: memref<384x128xbf16, #tpu.memory_space<vmem>>, %arg3: memref<384x128xbf16, #tpu.memory_space<vmem>>, %arg4: memref<1x128xf32, #tpu.memory_space<vmem>>, %arg5: memref<1x128xf32, #tpu.memory_space<vmem>>, %arg6: memref<1x128xf32, #tpu.memory_space<vmem>>, %arg7: memref<1x128xf32, #tpu.memory_space<vmem>>, %arg8: memref<32x128xbf16, #tpu.memory_space<vmem>>) attributes {dimension_semantics = [#tpu.dimension_semantics<parallel>], iteration_bounds = array<i64: 1>, scalar_prefetch = 0 : i64, scratch_operands = 0 : i64, tpu.core_type = #tpu.core_type<tc>, window_params = [{transform_indices = @transform_0, window_bounds = array<i64: 32, 128>}, {pipeline_mode = #tpu.pipeline_mode<synchronous>, transform_indices = @transform_1, window_bounds = array<i64: 384, 128>}, {pipeline_mode = #tpu.pipeline_mode<synchronous>, transform_indices = @transform_2, window_bounds = array<i64: 384, 128>}, {pipeline_mode = #tpu.pipeline_mode<synchronous>, transform_indices = @transform_3, window_bounds = array<i64: 1, 128>}, {pipeline_mode = #tpu.pipeline_mode<synchronous>, transform_indices = @transform_4, window_bounds = array<i64: 1, 128>}, {pipeline_mode = #tpu.pipeline_mode<synchronous>, transform_indices = @transform_5, window_bounds = array<i64: 1, 128>}, {pipeline_mode = #tpu.pipeline_mode<synchronous>, transform_indices = @transform_6, window_bounds = array<i64: 1, 128>}, {transform_indices = @transform_7, window_bounds = array<i64: 32, 128>}]} {
    %0 = tpu.iota {dimensions = array<i32: 0>} : vector<32x128xi32>
    %c16_i32 = arith.constant 16 : i32
    %c0_i32 = arith.constant 0 : i32
    %1 = arith.cmpi eq, %c16_i32, %c0_i32 : i32
    %c1_i32 = arith.constant 1 : i32
    %2 = arith.select %1, %c1_i32, %c16_i32 : i32
    %3 = vector.broadcast %2 : i32 to vector<32x128xi32>
    %4 = arith.remsi %0, %3 : vector<32x128xi32>
    %c0_i32_0 = arith.constant 0 : i32
    %5 = vector.broadcast %c0_i32_0 : i32 to vector<32x128xi32>
    %6 = arith.cmpi ne, %4, %5 : vector<32x128xi32>
    %c0_i32_1 = arith.constant 0 : i32
    %7 = vector.broadcast %c0_i32_1 : i32 to vector<32x128xi32>
    %8 = arith.cmpi slt, %4, %7 : vector<32x128xi32>
    %c0_i32_2 = arith.constant 0 : i32
    %9 = arith.cmpi slt, %2, %c0_i32_2 : i32
    %10 = vector.broadcast %9 : i1 to vector<32x128xi1>
    %11 = vector.broadcast %10 : vector<32x128xi1> to vector<32x128xi1>
    %12 = arith.xori %8, %11 : vector<32x128xi1>
    %13 = arith.andi %12, %6 : vector<32x128xi1>
    %14 = vector.broadcast %2 : i32 to vector<32x128xi32>
    %15 = arith.addi %4, %14 : vector<32x128xi32>
    %16 = arith.select %13, %15, %4 : vector<32x128xi1>, vector<32x128xi32>
    %c1_i32_3 = arith.constant 1 : i32
    %17 = vector.broadcast %c1_i32_3 : i32 to vector<32x128xi32>
    %18 = arith.cmpi sge, %16, %17 : vector<32x128xi32>
    %c14_i32 = arith.constant 14 : i32
    %19 = vector.broadcast %c14_i32 : i32 to vector<32x128xi32>
    %20 = arith.cmpi sle, %16, %19 : vector<32x128xi32>
    %c0 = arith.constant 0 : index
    %c0_4 = arith.constant 0 : index
    %21 = vector.load %arg1[%c0, %c0_4] : memref<32x128xbf16, #tpu.memory_space<vmem>>, vector<32x128xbf16>
    %22 = arith.extf %21 : vector<32x128xbf16> to vector<32x128xf32>
    %c1_i32_5 = arith.constant 1 : i32
    %23 = tpu.dynamic_rotate %22 by %c1_i32_5 dim 0 : vector<32x128xf32>, i32 -> vector<32x128xf32>
    %cst = arith.constant 0.000000e+00 : f32
    %24 = vector.broadcast %cst : f32 to vector<32x128xf32>
    %25 = arith.select %18, %23, %24 : vector<32x128xi1>, vector<32x128xf32>
    %c31_i32 = arith.constant 31 : i32
    %26 = tpu.dynamic_rotate %22 by %c31_i32 dim 0 : vector<32x128xf32>, i32 -> vector<32x128xf32>
    %cst_6 = arith.constant 0.000000e+00 : f32
    %27 = vector.broadcast %cst_6 : f32 to vector<32x128xf32>
    %28 = arith.select %20, %26, %27 : vector<32x128xi1>, vector<32x128xf32>
    %29 = tpu.concatenate %25, %22, %28 in 1 : vector<32x128xf32>, vector<32x128xf32>, vector<32x128xf32> -> vector<32x384xf32>
    %30 = arith.truncf %29 : vector<32x384xf32> to vector<32x384xbf16>
    %c0_7 = arith.constant 0 : index
    %c0_8 = arith.constant 0 : index
    %31 = vector.load %arg2[%c0_7, %c0_8] : memref<384x128xbf16, #tpu.memory_space<vmem>>, vector<384x128xbf16>
    %cst_9 = arith.constant dense<0.000000e+00> : vector<32x128xf32>
    %32 = tpu.matmul %30, %31, %cst_9 {dimension_numbers = #tpu.dot_dimension_numbers<[1], [0], [0], [1], [0, 0, 1, 1], [], []>} : vector<32x384xbf16>, vector<384x128xbf16>, vector<32x128xf32> -> vector<32x128xf32>
    %c0_10 = arith.constant 0 : index
    %c0_11 = arith.constant 0 : index
    %33 = vector.load %arg4[%c0_10, %c0_11] : memref<1x128xf32, #tpu.memory_space<vmem>>, vector<1x128xf32>
    %34 = vector.shape_cast %33 : vector<1x128xf32> to vector<128xf32>
    %35 = vector.shape_cast %34 : vector<128xf32> to vector<1x128xf32>
    %36 = vector.broadcast %35 : vector<1x128xf32> to vector<32x128xf32>
    %37 = arith.mulf %32, %36 : vector<32x128xf32>
    %c0_12 = arith.constant 0 : index
    %c0_13 = arith.constant 0 : index
    %38 = vector.load %arg5[%c0_12, %c0_13] : memref<1x128xf32, #tpu.memory_space<vmem>>, vector<1x128xf32>
    %39 = vector.shape_cast %38 : vector<1x128xf32> to vector<128xf32>
    %40 = vector.shape_cast %39 : vector<128xf32> to vector<1x128xf32>
    %41 = vector.broadcast %40 : vector<1x128xf32> to vector<32x128xf32>
    %42 = arith.addf %37, %41 : vector<32x128xf32>
    %cst_14 = arith.constant 0.000000e+00 : f32
    %43 = vector.broadcast %cst_14 : f32 to vector<32x128xf32>
    %44 = arith.maximumf %42, %43 : vector<32x128xf32>
    %c1_i32_15 = arith.constant 1 : i32
    %45 = tpu.dynamic_rotate %44 by %c1_i32_15 dim 0 : vector<32x128xf32>, i32 -> vector<32x128xf32>
    %cst_16 = arith.constant 0.000000e+00 : f32
    %46 = vector.broadcast %cst_16 : f32 to vector<32x128xf32>
    %47 = arith.select %18, %45, %46 : vector<32x128xi1>, vector<32x128xf32>
    %c31_i32_17 = arith.constant 31 : i32
    %48 = tpu.dynamic_rotate %44 by %c31_i32_17 dim 0 : vector<32x128xf32>, i32 -> vector<32x128xf32>
    %cst_18 = arith.constant 0.000000e+00 : f32
    %49 = vector.broadcast %cst_18 : f32 to vector<32x128xf32>
    %50 = arith.select %20, %48, %49 : vector<32x128xi1>, vector<32x128xf32>
    %51 = tpu.concatenate %47, %44, %50 in 1 : vector<32x128xf32>, vector<32x128xf32>, vector<32x128xf32> -> vector<32x384xf32>
    %52 = arith.truncf %51 : vector<32x384xf32> to vector<32x384xbf16>
    %c0_19 = arith.constant 0 : index
    %c0_20 = arith.constant 0 : index
    %53 = vector.load %arg3[%c0_19, %c0_20] : memref<384x128xbf16, #tpu.memory_space<vmem>>, vector<384x128xbf16>
    %cst_21 = arith.constant dense<0.000000e+00> : vector<32x128xf32>
    %54 = tpu.matmul %52, %53, %cst_21 {dimension_numbers = #tpu.dot_dimension_numbers<[1], [0], [0], [1], [0, 0, 1, 1], [], []>} : vector<32x384xbf16>, vector<384x128xbf16>, vector<32x128xf32> -> vector<32x128xf32>
    %c0_22 = arith.constant 0 : index
    %c0_23 = arith.constant 0 : index
    %55 = vector.load %arg6[%c0_22, %c0_23] : memref<1x128xf32, #tpu.memory_space<vmem>>, vector<1x128xf32>
    %56 = vector.shape_cast %55 : vector<1x128xf32> to vector<128xf32>
    %57 = vector.shape_cast %56 : vector<128xf32> to vector<1x128xf32>
    %58 = vector.broadcast %57 : vector<1x128xf32> to vector<32x128xf32>
    %59 = arith.mulf %54, %58 : vector<32x128xf32>
    %c0_24 = arith.constant 0 : index
    %c0_25 = arith.constant 0 : index
    %60 = vector.load %arg7[%c0_24, %c0_25] : memref<1x128xf32, #tpu.memory_space<vmem>>, vector<1x128xf32>
    %61 = vector.shape_cast %60 : vector<1x128xf32> to vector<128xf32>
    %62 = vector.shape_cast %61 : vector<128xf32> to vector<1x128xf32>
    %63 = vector.broadcast %62 : vector<1x128xf32> to vector<32x128xf32>
    %64 = arith.addf %59, %63 : vector<32x128xf32>
    %65 = arith.addf %64, %22 : vector<32x128xf32>
    %cst_26 = arith.constant 0.000000e+00 : f32
    %66 = vector.broadcast %cst_26 : f32 to vector<32x128xf32>
    %67 = arith.maximumf %65, %66 : vector<32x128xf32>
    %68 = arith.truncf %67 : vector<32x128xf32> to vector<32x128xbf16>
    %c0_27 = arith.constant 0 : index
    %c0_28 = arith.constant 0 : index
    %69 = vector.load %arg8[%c0_27, %c0_28] : memref<32x128xbf16, #tpu.memory_space<vmem>>, vector<32x128xbf16>
    tpu.vector_store %arg8[%c0_27, %c0_28], %68 {strides = array<i32>} : memref<32x128xbf16, #tpu.memory_space<vmem>>, vector<32x128xbf16>,
    return
  }
  func.func @transform_0(%arg0: i32) -> (i32, i32) {
    %c0_i32 = arith.constant 0 : i32
    %c0_i32_0 = arith.constant 0 : i32
    return %arg0, %c0_i32 : i32, i32
  }
  func.func @transform_1(%arg0: i32) -> (i32, i32) {
    %c0_i32 = arith.constant 0 : i32
    %c0_i32_0 = arith.constant 0 : i32
    %c0_i32_1 = arith.constant 0 : i32
    return %c0_i32, %c0_i32_0 : i32, i32
  }
  func.func @transform_2(%arg0: i32) -> (i32, i32) {
    %c0_i32 = arith.constant 0 : i32
    %c0_i32_0 = arith.constant 0 : i32
    %c0_i32_1 = arith.constant 0 : i32
    return %c0_i32, %c0_i32_0 : i32, i32
  }
  func.func @transform_3(%arg0: i32) -> (i32, i32) {
    %c0_i32 = arith.constant 0 : i32
    %c0_i32_0 = arith.constant 0 : i32
    %c0_i32_1 = arith.constant 0 : i32
    return %c0_i32, %c0_i32_0 : i32, i32
  }
  func.func @transform_4(%arg0: i32) -> (i32, i32) {
    %c0_i32 = arith.constant 0 : i32
    %c0_i32_0 = arith.constant 0 : i32
    %c0_i32_1 = arith.constant 0 : i32
    return %c0_i32, %c0_i32_0 : i32, i32
  }
  func.func @transform_5(%arg0: i32) -> (i32, i32) {
    %c0_i32 = arith.constant 0 : i32
    %c0_i32_0 = arith.constant 0 : i32
    %c0_i32_1 = arith.constant 0 : i32
    return %c0_i32, %c0_i32_0 : i32, i32
  }
  func.func @transform_6(%arg0: i32) -> (i32, i32) {
    %c0_i32 = arith.constant 0 : i32
    %c0_i32_0 = arith.constant 0 : i32
    %c0_i32_1 = arith.constant 0 : i32
    return %c0_i32, %c0_i32_0 : i32, i32
  }
  func.func @transform_7(%arg0: i32) -> (i32, i32) {
    %c0_i32 = arith.constant 0 : i32
    %c0_i32_0 = arith.constant 0 : i32
    return %arg0, %c0_i32 : i32, i32
  }
}

</mosaic_0001>

<llo_original>
// kernel: tpu_custom_call.1
$region0: #{tpu_custom_call.1}
  #allocation0 [shape = 'u32[]', space=smem, size = 0x4, offset = 0x4, fixed_abs, tag = 'smem constant byte address 0x4 - core index']
  #allocation1 [shape = 'u32[144,128]{1,0:T(1,128)}', space=vmem, size = 0x12000, scoped, tag = 'internal scratch']
  %s0 = inlined_call_operand.hbm [shape: bf16[32,128], index: 0, kind: input, shape index: {}]
  %s1 = inlined_call_operand.hbm [shape: bf16[384,128], index: 1, kind: input, shape index: {}]
  %s2 = inlined_call_operand.hbm [shape: bf16[384,128], index: 2, kind: input, shape index: {}]
  %s3 = inlined_call_operand.vmem [shape: f32[1,128], index: 3, kind: input, shape index: {}]
  %s4 = inlined_call_operand.vmem [shape: f32[1,128], index: 4, kind: input, shape index: {}]
  %s5 = inlined_call_operand.vmem [shape: f32[1,128], index: 5, kind: input, shape index: {}]
  %s6 = inlined_call_operand.vmem [shape: f32[1,128], index: 6, kind: input, shape index: {}]
  %s7 = inlined_call_operand.hbm [shape: bf16[32,128], index: 7, kind: output, shape index: {}]
  %s8 = sld [smem:[#allocation0]]
  $region50: #{tpu_custom_call.1} parent=0
    _
  %s10 = ssub.s32 1, %s8
  %s11 = scalar_select 0, %s10, %s8
  $region1: #{tpu_custom_call.1} parent=0
    #allocation2 [shape = 'u8[8192]{0}', space=vmem, size = 0x2000, scoped, tag = 'input window, operand 0, single buffered']
    #allocation3 [shape = 's32[1]{0}', space=sflag, size = 0x4, scoped, tag = 'scoped memory for tpu_custom_call.1']
    #allocation4 [shape = 's32[1]{0}', space=sflag, size = 0x4, scoped, tag = 'scoped memory for tpu_custom_call.1']
    #allocation5 [shape = 'u8[98304]{0}', space=vmem, size = 0x18000, scoped, tag = 'input window, operand 1, single buffered']
    #allocation6 [shape = 's32[1]{0}', space=sflag, size = 0x4, scoped, tag = 'scoped memory for tpu_custom_call.1']
    #allocation7 [shape = 'u8[98304]{0}', space=vmem, size = 0x18000, scoped, tag = 'input window, operand 2, single buffered']
    #allocation8 [shape = 'u8[8192]{0}', space=vmem, size = 0x2000, scoped, tag = 'output window, operand 0, single buffered']
    %12 = vsyncpa [#allocation3], 0
    %13 = vsyncpa [#allocation6], 0
    %14 = vsyncpa [#allocation4], 0
    // Predicated region
    $region2: #{tpu_custom_call.1} parent=1 // pred_check
      _
    $region3: #{tpu_custom_call.1} parent=1 // pred_check_branch
      %16 = sbr.rel (0) target = $region5
    $region4: #{tpu_custom_call.1} parent=1 // pred_region
      %s18 = ssub.s32 256, 256
      %19 = vsyncadd [#allocation3], %s18
      %s20 = sshll.u32 [#allocation2], 4
      %s21 = int_to_ptr.vmem [resolvable:$true] %s20
      %26 = dma.hbm_to_vmem [thread:$0]  %s0, 256, %s21, [#allocation3], 64, 64, 4
    $region5: #{tpu_custom_call.1} parent=1 // pred_fallthru
      _
    // Predicated region
    $region6: #{tpu_custom_call.1} parent=1 // pred_check
      _
    $region7: #{tpu_custom_call.1} parent=1 // pred_check_branch
      %28 = sbr.rel (0) target = $region9
    $region8: #{tpu_custom_call.1} parent=1 // pred_region
      %s30 = ssub.s32 3072, 3072
      %31 = vsyncadd [#allocation6], %s30
      %s32 = sshll.u32 [#allocation5], 4
      %s33 = int_to_ptr.vmem [resolvable:$true] %s32
      %38 = dma.hbm_to_vmem [thread:$0]  %s1, 3072, %s33, [#allocation6], 64, 64, 4
    $region9: #{tpu_custom_call.1} parent=1 // pred_fallthru
      _
    // Predicated region
    $region10: #{tpu_custom_call.1} parent=1 // pred_check
      _
    $region11: #{tpu_custom_call.1} parent=1 // pred_check_branch
      %40 = sbr.rel (0) target = $region13
    $region12: #{tpu_custom_call.1} parent=1 // pred_region
      %s42 = ssub.s32 3072, 3072
      %43 = vsyncadd [#allocation6], %s42
      %s44 = sshll.u32 [#allocation7], 4
      %s45 = int_to_ptr.vmem [resolvable:$true] %s44
      %50 = dma.hbm_to_vmem [thread:$0]  %s2, 3072, %s45, [#allocation6], 64, 64, 4
    $region13: #{tpu_custom_call.1} parent=1 // pred_fallthru
      _
    // Predicated region
    $region14: #{tpu_custom_call.1} parent=1 // pred_check
      _
    $region15: #{tpu_custom_call.1} parent=1 // pred_check_branch
      %52 = sbr.rel (0) target = $region17
    $region16: #{tpu_custom_call.1} parent=1 // pred_region
      _
    $region17: #{tpu_custom_call.1} parent=1 // pred_fallthru
      _
    // Predicated region
    $region18: #{tpu_custom_call.1} parent=1 // pred_check
      _
    $region19: #{tpu_custom_call.1} parent=1 // pred_check_branch
      %54 = sbr.rel (0) target = $region21
    $region20: #{tpu_custom_call.1} parent=1 // pred_region
      _
    $region21: #{tpu_custom_call.1} parent=1 // pred_fallthru
      _
    // Predicated region
    $region22: #{tpu_custom_call.1} parent=1 // pred_check
      _
    $region23: #{tpu_custom_call.1} parent=1 // pred_check_branch
      %56 = sbr.rel (0) target = $region25
    $region24: #{tpu_custom_call.1} parent=1 // pred_region
      _
    $region25: #{tpu_custom_call.1} parent=1 // pred_fallthru
      _
    // Predicated region
    $region26: #{tpu_custom_call.1} parent=1 // pred_check
      _
    $region27: #{tpu_custom_call.1} parent=1 // pred_check_branch
      %58 = sbr.rel (0) target = $region29
    $region28: #{tpu_custom_call.1} parent=1 // pred_region
      _
    $region29: #{tpu_custom_call.1} parent=1 // pred_fallthru
      _
    // Predicated region
    $region30: #{tpu_custom_call.1} parent=1 // pred_check
      _
    $region31: #{tpu_custom_call.1} parent=1 // pred_check_branch
      %60 = sbr.rel (0) target = $region33
    $region32: #{tpu_custom_call.1} parent=1 // pred_region
      %61 = dma.done [#allocation3], 256
    $region33: #{tpu_custom_call.1} parent=1 // pred_fallthru
      _
    // Predicated region
    $region34: #{tpu_custom_call.1} parent=1 // pred_check
      _
    $region35: #{tpu_custom_call.1} parent=1 // pred_check_branch
      %63 = sbr.rel (0) target = $region37
    $region36: #{tpu_custom_call.1} parent=1 // pred_region
      %64 = dma.done [#allocation6], 3072
    $region37: #{tpu_custom_call.1} parent=1 // pred_fallthru
      _
    // Predicated region
    $region38: #{tpu_custom_call.1} parent=1 // pred_check
      _
    $region39: #{tpu_custom_call.1} parent=1 // pred_check_branch
      %66 = sbr.rel (0) target = $region41
    $region40: #{tpu_custom_call.1} parent=1 // pred_region
      %67 = dma.done [#allocation6], 3072
    $region41: #{tpu_custom_call.1} parent=1 // pred_fallthru
      _
    %v69 = vlaneseq
    %v70 = vshrl.u32 %v69, 7
    %v71 = vadd.s32 %v70, 8
    %v72 = vadd.s32 %v70, 16
    %v73 = vadd.s32 %v70, 24
    %vm74 = vcmp.lt.s32.totalorder %v70, 0
    %v75 = vsub.s32 0, %v70
    %v76 = vsel %vm74, %v75, %v70
    %v77 = vshrl.u32 %v76, 4
    %v78 = vand.u32 %v76, 15
    %v79 = vsub.s32 0, %v78
    %v80 = vsel %vm74, %v79, %v78
    %vm81 = vcmp.lt.s32.totalorder %v71, 0
    %v82 = vsub.s32 0, %v71
    %v83 = vsel %vm81, %v82, %v71
    %v84 = vshrl.u32 %v83, 4
    %v85 = vand.u32 %v83, 15
    %v86 = vsub.s32 0, %v85
    %v87 = vsel %vm81, %v86, %v85
    %vm88 = vcmp.lt.s32.totalorder %v72, 0
    %v89 = vsub.s32 0, %v72
    %v90 = vsel %vm88, %v89, %v72
    %v91 = vshrl.u32 %v90, 4
    %v92 = vand.u32 %v90, 15
    %v93 = vsub.s32 0, %v92
    %v94 = vsel %vm88, %v93, %v92
    %vm95 = vcmp.lt.s32.totalorder %v73, 0
    %v96 = vsub.s32 0, %v73
    %v97 = vsel %vm95, %v96, %v73
    %v98 = vshrl.u32 %v97, 4
    %v99 = vand.u32 %v97, 15
    %v100 = vsub.s32 0, %v99
    %v101 = vsel %vm95, %v100, %v99
    %vm102 = vcmp.ne.s32.totalorder %v80, 0
    %vm103 = vcmp.ne.s32.totalorder %v87, 0
    %vm104 = vcmp.ne.s32.totalorder %v94, 0
    %vm105 = vcmp.ne.s32.totalorder %v101, 0
    %vm106 = vcmp.lt.s32.totalorder %v80, 0
    %vm107 = vcmp.lt.s32.totalorder %v87, 0
    %vm108 = vcmp.lt.s32.totalorder %v94, 0
    %vm109 = vcmp.lt.s32.totalorder %v101, 0
    %vm110 = vmand %vm106, %vm102
    %vm111 = vmand %vm107, %vm103
    %vm112 = vmand %vm108, %vm104
    %vm113 = vmand %vm109, %vm105
    %v114 = vadd.s32 %v80, 16
    %v115 = vadd.s32 %v87, 16
    %v116 = vadd.s32 %v94, 16
    %v117 = vadd.s32 %v101, 16
    %v118 = vsel %vm110, %v114, %v80
    %v119 = vsel %vm111, %v115, %v87
    %v120 = vsel %vm112, %v116, %v94
    %v121 = vsel %vm113, %v117, %v101
    %vm122 = vcmp.ge.s32.totalorder %v118, 1
    %vm123 = vcmp.ge.s32.totalorder %v119, 1
    %vm124 = vcmp.ge.s32.totalorder %v120, 1
    %vm125 = vcmp.ge.s32.totalorder %v121, 1
    %vm126 = vcmp.le.s32.totalorder %v118, 14
    %vm127 = vcmp.le.s32.totalorder %v119, 14
    %vm128 = vcmp.le.s32.totalorder %v120, 14
    %vm129 = vcmp.le.s32.totalorder %v121, 14
    %v130 = vld [vmem:[#allocation2] sm:$0xf]
    %v131 = vld [vmem:[#allocation2 + $0x4] sm:$0xf]
    %v132 = vld [vmem:[#allocation2 + $0x8] sm:$0xf]
    %v133 = vld [vmem:[#allocation2 + $0xc] sm:$0xf]
    %v134 = vunpack.c.l.bf16 %v130
    %v135 = vunpack.c.l.bf16 %v131
    %v136 = vunpack.c.l.bf16 %v132
    %v137 = vunpack.c.l.bf16 %v133
    %v138 = vrot.slane %v134, 7
    %v139 = vrot.slane %v135, 7
    %v140 = vrot.slane %v136, 7
    %v141 = vrot.slane %v137, 7
    %vm142 = vcmp.lt.s32.totalorder %v70, 1
    %v143 = vsel %vm142, %v140, %v141
    %v144 = vsel %vm142, %v139, %v140
    %v145 = vsel %vm142, %v138, %v139
    %v146 = vsel %vm142, %v141, %v138
    %v147 = vsel %vm122, %v146, 0.0
    %v148 = vsel %vm123, %v145, 0.0
    %v149 = vsel %vm124, %v144, 0.0
    %v150 = vsel %vm125, %v143, 0.0
    %v151 = vrot.slane %v134, 1
    %v152 = vrot.slane %v135, 1
    %v153 = vrot.slane %v136, 1
    %v154 = vrot.slane %v137, 1
    %vm155 = vcmp.lt.s32.totalorder %v70, 7
    %v156 = vsel %vm155, %v153, %v154
    %v157 = vsel %vm155, %v152, %v153
    %v158 = vsel %vm155, %v151, %v152
    %v159 = vsel %vm155, %v154, %v151
    %v160 = vsel %vm126, %v158, 0.0
    %v161 = vsel %vm127, %v157, 0.0
    %v162 = vsel %vm128, %v156, 0.0
    %v163 = vsel %vm129, %v159, 0.0
    %v164 = vpack.c.bf16 %v148, %v147
    %v165 = vpack.c.bf16 %v135, %v134
    %v166 = vpack.c.bf16 %v161, %v160
    %v167 = vpack.c.bf16 %v150, %v149
    %v168 = vpack.c.bf16 %v137, %v136
    %v169 = vpack.c.bf16 %v163, %v162
    %v170 = vld [vmem:[#allocation5] sm:$0xf]
    %v171 = vld [vmem:[#allocation5 + $0x4] sm:$0xf]
    %v172 = vld [vmem:[#allocation5 + $0x8] sm:$0xf]
    %v173 = vld [vmem:[#allocation5 + $0xc] sm:$0xf]
    %v174 = vld [vmem:[#allocation5 + $0x10] sm:$0xf]
    %v175 = vld [vmem:[#allocation5 + $0x14] sm:$0xf]
    %v176 = vld [vmem:[#allocation5 + $0x18] sm:$0xf]
    %v177 = vld [vmem:[#allocation5 + $0x1c] sm:$0xf]
    %v178 = vld [vmem:[#allocation5 + $0x20] sm:$0xf]
    %v179 = vld [vmem:[#allocation5 + $0x24] sm:$0xf]
    %v180 = vld [vmem:[#allocation5 + $0x28] sm:$0xf]
    %v181 = vld [vmem:[#allocation5 + $0x2c] sm:$0xf]
    %v182 = vld [vmem:[#allocation5 + $0x30] sm:$0xf]
    %v183 = vld [vmem:[#allocation5 + $0x34] sm:$0xf]
    %v184 = vld [vmem:[#allocation5 + $0x38] sm:$0xf]
    %v185 = vld [vmem:[#allocation5 + $0x3c] sm:$0xf]
    %v186 = vld [vmem:[#allocation5 + $0x40] sm:$0xf]
    %v187 = vld [vmem:[#allocation5 + $0x44] sm:$0xf]
    %v188 = vld [vmem:[#allocation5 + $0x48] sm:$0xf]
    %v189 = vld [vmem:[#allocation5 + $0x4c] sm:$0xf]
    %v190 = vld [vmem:[#allocation5 + $0x50] sm:$0xf]
    %v191 = vld [vmem:[#allocation5 + $0x54] sm:$0xf]
    %v192 = vld [vmem:[#allocation5 + $0x58] sm:$0xf]
    %v193 = vld [vmem:[#allocation5 + $0x5c] sm:$0xf]
    %v194 = vld [vmem:[#allocation5 + $0x60] sm:$0xf]
    %v195 = vld [vmem:[#allocation5 + $0x64] sm:$0xf]
    %v196 = vld [vmem:[#allocation5 + $0x68] sm:$0xf]
    %v197 = vld [vmem:[#allocation5 + $0x6c] sm:$0xf]
    %v198 = vld [vmem:[#allocation5 + $0x70] sm:$0xf]
    %v199 = vld [vmem:[#allocation5 + $0x74] sm:$0xf]
    %v200 = vld [vmem:[#allocation5 + $0x78] sm:$0xf]
    %v201 = vld [vmem:[#allocation5 + $0x7c] sm:$0xf]
    %v202 = vld [vmem:[#allocation5 + $0x80] sm:$0xf]
    %v203 = vld [vmem:[#allocation5 + $0x84] sm:$0xf]
    %v204 = vld [vmem:[#allocation5 + $0x88] sm:$0xf]
    %v205 = vld [vmem:[#allocation5 + $0x8c] sm:$0xf]
    %v206 = vld [vmem:[#allocation5 + $0x90] sm:$0xf]
    %v207 = vld [vmem:[#allocation5 + $0x94] sm:$0xf]
    %v208 = vld [vmem:[#allocation5 + $0x98] sm:$0xf]
    %v209 = vld [vmem:[#allocation5 + $0x9c] sm:$0xf]
    %v210 = vld [vmem:[#allocation5 + $0xa0] sm:$0xf]
    %v211 = vld [vmem:[#allocation5 + $0xa4] sm:$0xf]
    %v212 = vld [vmem:[#allocation5 + $0xa8] sm:$0xf]
    %v213 = vld [vmem:[#allocation5 + $0xac] sm:$0xf]
    %v214 = vld [vmem:[#allocation5 + $0xb0] sm:$0xf]
    %v215 = vld [vmem:[#allocation5 + $0xb4] sm:$0xf]
    %v216 = vld [vmem:[#allocation5 + $0xb8] sm:$0xf]
    %v217 = vld [vmem:[#allocation5 + $0xbc] sm:$0xf]
    %v266 = vunpack.c.l.b16 %v170
    %v267 = vunpack.c.l.b16 %v171
    %v268 = vunpack.c.l.b16 %v172
    %v269 = vunpack.c.l.b16 %v173
    %v270 = vunpack.c.l.b16 %v174
    %v271 = vunpack.c.l.b16 %v175
    %v272 = vunpack.c.l.b16 %v176
    %v273 = vunpack.c.l.b16 %v177
    %v274 = vunpack.c.l.b16 %v178
    %v275 = vunpack.c.l.b16 %v179
    %v276 = vunpack.c.l.b16 %v180
    %v277 = vunpack.c.l.b16 %v181
    %v278 = vunpack.c.l.b16 %v182
    %v279 = vunpack.c.l.b16 %v183
    %v280 = vunpack.c.l.b16 %v184
    %v281 = vunpack.c.l.b16 %v185
    %v282 = vunpack.c.l.b16 %v186
    %v283 = vunpack.c.l.b16 %v187
    %v284 = vunpack.c.l.b16 %v188
    %v285 = vunpack.c.l.b16 %v189
    %v286 = vunpack.c.l.b16 %v190
    %v287 = vunpack.c.l.b16 %v191
    %v288 = vunpack.c.l.b16 %v192
    %v289 = vunpack.c.l.b16 %v193
    %v290 = vunpack.c.l.b16 %v194
    %v291 = vunpack.c.l.b16 %v195
    %v292 = vunpack.c.l.b16 %v196
    %v293 = vunpack.c.l.b16 %v197
    %v294 = vunpack.c.l.b16 %v198
    %v295 = vunpack.c.l.b16 %v199
    %v296 = vunpack.c.l.b16 %v200
    %v297 = vunpack.c.l.b16 %v201
    %v298 = vunpack.c.l.b16 %v202
    %v299 = vunpack.c.l.b16 %v203
    %v300 = vunpack.c.l.b16 %v204
    %v301 = vunpack.c.l.b16 %v205
    %v302 = vunpack.c.l.b16 %v206
    %v303 = vunpack.c.l.b16 %v207
    %v304 = vunpack.c.l.b16 %v208
    %v305 = vunpack.c.l.b16 %v209
    %v306 = vunpack.c.l.b16 %v210
    %v307 = vunpack.c.l.b16 %v211
    %v308 = vunpack.c.l.b16 %v212
    %v309 = vunpack.c.l.b16 %v213
    %v310 = vunpack.c.l.b16 %v214
    %v311 = vunpack.c.l.b16 %v215
    %v312 = vunpack.c.l.b16 %v216
    %v313 = vunpack.c.l.b16 %v217
    %v314 = vpack.c.b16 %v267, %v266
    %v315 = vpack.c.b16 %v269, %v268
    %v316 = vpack.c.b16 %v271, %v270
    %v317 = vpack.c.b16 %v273, %v272
    %v318 = vpack.c.b16 %v275, %v274
    %v319 = vpack.c.b16 %v277, %v276
    %v320 = vpack.c.b16 %v279, %v278
    %v321 = vpack.c.b16 %v281, %v280
    %v322 = vpack.c.b16 %v283, %v282
    %v323 = vpack.c.b16 %v285, %v284
    %v324 = vpack.c.b16 %v287, %v286
    %v325 = vpack.c.b16 %v289, %v288
    %v326 = vpack.c.b16 %v291, %v290
    %v327 = vpack.c.b16 %v293, %v292
    %v328 = vpack.c.b16 %v295, %v294
    %v329 = vpack.c.b16 %v297, %v296
    %v330 = vpack.c.b16 %v299, %v298
    %v331 = vpack.c.b16 %v301, %v300
    %v332 = vpack.c.b16 %v303, %v302
    %v333 = vpack.c.b16 %v305, %v304
    %v334 = vpack.c.b16 %v307, %v306
    %v335 = vpack.c.b16 %v309, %v308
    %v336 = vpack.c.b16 %v311, %v310
    %v337 = vpack.c.b16 %v313, %v312
    %362 = vmatprep.subr.bf16.mxu0 0
    %363 = vmatpush1.bf16.msra.mxu0 %v314
    %364 = vmatprep.subr.bf16.mxu0 0
    %365 = vmatpush1.bf16.msra.mxu0 %v315
    %366 = vmatprep.subr.bf16.mxu0 0
    %367 = vmatpush1.bf16.msra.mxu0 %v316
    %368 = vmatprep.subr.bf16.mxu0 0
    %369 = vmatpush1.bf16.msra.mxu0 %v317
    %370 = vmatprep.subr.bf16.mxu0 0
    %371 = vmatpush1.bf16.msra.mxu0 %v318
    %372 = vmatprep.subr.bf16.mxu0 0
    %373 = vmatpush1.bf16.msra.mxu0 %v319
    %374 = vmatprep.subr.bf16.mxu0 0
    %375 = vmatpush1.bf16.msra.mxu0 %v320
    %376 = vmatprep.subr.bf16.mxu0 0
    %377 = vmatpush1.bf16.msra.mxu0 %v321
    %378 = vmatprep.subr.bf16.mxu0 0
    %379 = vmatpush1.bf16.msra.mxu0 %v322
    %380 = vmatprep.subr.bf16.mxu0 0
    %381 = vmatpush1.bf16.msra.mxu0 %v323
    %382 = vmatprep.subr.bf16.mxu0 0
    %383 = vmatpush1.bf16.msra.mxu0 %v324
    %384 = vmatprep.subr.bf16.mxu0 0
    %385 = vmatpush1.bf16.msra.mxu0 %v325
    %386 = vmatprep.subr.bf16.mxu0 0
    %387 = vmatpush1.bf16.msra.mxu0 %v326
    %388 = vmatprep.subr.bf16.mxu0 0
    %389 = vmatpush1.bf16.msra.mxu0 %v327
    %390 = vmatprep.subr.bf16.mxu0 0
    %391 = vmatpush1.bf16.msra.mxu0 %v328
    %392 = vmatprep.subr.bf16.mxu0 0
    %393 = vmatpush1.bf16.msra.mxu0 %v329
    %394 = vmatprep.mubr.bf16.mxu0 %v165
    %395 = vmatmul.mubr.bf16.gmra.mrb[0].mxu0 %v164
    %v396 = vpop.f32.mrb[0].mxu0
    %v397 = vadd.f32 0.0, %v396
    %v398 = vpop.f32.mrb[0].mxu0
    %v399 = vpop.f32.mrb[0].mxu0
    %v400 = vadd.f32 0.0, %v399
    %v401 = vpop.f32.mrb[0].mxu0
    %402 = vmatprep.mubr.bf16.mxu0 %v168
    %403 = vmatmul.mubr.bf16.gmra.mrb[0].mxu0 %v167
    %v404 = vpop.f32.mrb[0].mxu0
    %v405 = vadd.f32 0.0, %v404
    %v406 = vpop.f32.mrb[0].mxu0
    %v407 = vpop.f32.mrb[0].mxu0
    %v408 = vadd.f32 0.0, %v407
    %v409 = vpop.f32.mrb[0].mxu0
    %410 = vdwg.mxu0
    %411 = vmatprep.subr.bf16.mxu0 0
    %412 = vmatpush1.bf16.msra.mxu0 %v330
    %413 = vmatprep.subr.bf16.mxu0 0
    %414 = vmatpush1.bf16.msra.mxu0 %v331
    %415 = vmatprep.subr.bf16.mxu0 0
    %416 = vmatpush1.bf16.msra.mxu0 %v332
    %417 = vmatprep.subr.bf16.mxu0 0
    %418 = vmatpush1.bf16.msra.mxu0 %v333
    %419 = vmatprep.subr.bf16.mxu0 0
    %420 = vmatpush1.bf16.msra.mxu0 %v334
    %421 = vmatprep.subr.bf16.mxu0 0
    %422 = vmatpush1.bf16.msra.mxu0 %v335
    %423 = vmatprep.subr.bf16.mxu0 0
    %424 = vmatpush1.bf16.msra.mxu0 %v336
    %425 = vmatprep.subr.bf16.mxu0 0
    %426 = vmatpush1.bf16.msra.mxu0 %v337
    %427 = vmatprep.subr.bf16.mxu0 0
    %428 = vmatpush1.bf16.msra.mxu0 0
    %429 = vmatprep.subr.bf16.mxu0 0
    %430 = vmatpush1.bf16.msra.mxu0 0
    %431 = vmatprep.subr.bf16.mxu0 0
    %432 = vmatpush1.bf16.msra.mxu0 0
    %433 = vmatprep.subr.bf16.mxu0 0
    %434 = vmatpush1.bf16.msra.mxu0 0
    %435 = vmatprep.subr.bf16.mxu0 0
    %436 = vmatpush1.bf16.msra.mxu0 0
    %437 = vmatprep.subr.bf16.mxu0 0
    %438 = vmatpush1.bf16.msra.mxu0 0
    %439 = vmatprep.subr.bf16.mxu0 0
    %440 = vmatpush1.bf16.msra.mxu0 0
    %441 = vmatprep.subr.bf16.mxu0 0
    %442 = vmatpush1.bf16.msra.mxu0 0
    %443 = vmatprep.mubr.bf16.mxu0 0
    %444 = vmatmul.mubr.bf16.gmra.mrb[0].mxu0 %v166
    %v445 = vpop.f32.mrb[0].mxu0
    %v446 = vadd.f32 %v397, %v445
    %v447 = vpop.f32.mrb[0].mxu0
    %v448 = vpop.f32.mrb[0].mxu0
    %v449 = vadd.f32 %v400, %v448
    %v450 = vpop.f32.mrb[0].mxu0
    %451 = vmatprep.mubr.bf16.mxu0 0
    %452 = vmatmul.mubr.bf16.gmra.mrb[0].mxu0 %v169
    %v453 = vpop.f32.mrb[0].mxu0
    %v454 = vadd.f32 %v405, %v453
    %v455 = vpop.f32.mrb[0].mxu0
    %v456 = vpop.f32.mrb[0].mxu0
    %v457 = vadd.f32 %v408, %v456
    %v458 = vpop.f32.mrb[0].mxu0
    %459 = vdwg.mxu0
    %v460 = vld [vmem:[%s3] sm:$0x1]
    %v462 = vlaneseq
    %v463 = vshrl.u32 %v462, 7
    %v464 = vsub.s32 0, %v463
    %v465 = vrot.slane %v460, %v464
    %v467 = vmul.f32 %v446, %v465
    %v468 = vmul.f32 %v449, %v465
    %v469 = vmul.f32 %v454, %v465
    %v470 = vmul.f32 %v457, %v465
    %v471 = vld [vmem:[%s4] sm:$0x1]
    %v473 = vlaneseq
    %v474 = vshrl.u32 %v473, 7
    %v475 = vsub.s32 0, %v474
    %v476 = vrot.slane %v471, %v475
    %v478 = vadd.f32 %v467, %v476
    %v479 = vadd.f32 %v468, %v476
    %v480 = vadd.f32 %v469, %v476
    %v481 = vadd.f32 %v470, %v476
    %v482 = vmax.f32 %v478, 0.0
    %v483 = vmax.f32 %v479, 0.0
    %v484 = vmax.f32 %v480, 0.0
    %v485 = vmax.f32 %v481, 0.0
    %v486 = vrot.slane %v482, 7
    %v487 = vrot.slane %v483, 7
    %v488 = vrot.slane %v484, 7
    %v489 = vrot.slane %v485, 7
    %v490 = vsel %vm142, %v488, %v489
    %v491 = vsel %vm142, %v487, %v488
    %v492 = vsel %vm142, %v486, %v487
    %v493 = vsel %vm142, %v489, %v486
    %v494 = vsel %vm122, %v493, 0.0
    %v495 = vsel %vm123, %v492, 0.0
    %v496 = vsel %vm124, %v491, 0.0
    %v497 = vsel %vm125, %v490, 0.0
    %v498 = vrot.slane %v482, 1
    %v499 = vrot.slane %v483, 1
    %v500 = vrot.slane %v484, 1
    %v501 = vrot.slane %v485, 1
    %v502 = vsel %vm155, %v500, %v501
    %v503 = vsel %vm155, %v499, %v500
    %v504 = vsel %vm155, %v498, %v499
    %v505 = vsel %vm155, %v501, %v498
    %v506 = vsel %vm126, %v504, 0.0
    %v507 = vsel %vm127, %v503, 0.0
    %v508 = vsel %vm128, %v502, 0.0
    %v509 = vsel %vm129, %v505, 0.0
    %v510 = vpack.c.bf16 %v495, %v494
    %v511 = vpack.c.bf16 %v483, %v482
    %v512 = vpack.c.bf16 %v507, %v506
    %v513 = vpack.c.bf16 %v497, %v496
    %v514 = vpack.c.bf16 %v485, %v484
    %v515 = vpack.c.bf16 %v509, %v508
    %v516 = vld [vmem:[#allocation7] sm:$0xf]
    %v517 = vld [vmem:[#allocation7 + $0x4] sm:$0xf]
    %v518 = vld [vmem:[#allocation7 + $0x8] sm:$0xf]
    %v519 = vld [vmem:[#allocation7 + $0xc] sm:$0xf]
    %v520 = vld [vmem:[#allocation7 + $0x10] sm:$0xf]
    %v521 = vld [vmem:[#allocation7 + $0x14] sm:$0xf]
    %v522 = vld [vmem:[#allocation7 + $0x18] sm:$0xf]
    %v523 = vld [vmem:[#allocation7 + $0x1c] sm:$0xf]
    %v524 = vld [vmem:[#allocation7 + $0x20] sm:$0xf]
    %v525 = vld [vmem:[#allocation7 + $0x24] sm:$0xf]
    %v526 = vld [vmem:[#allocation7 + $0x28] sm:$0xf]
    %v527 = vld [vmem:[#allocation7 + $0x2c] sm:$0xf]
    %v528 = vld [vmem:[#allocation7 + $0x30] sm:$0xf]
    %v529 = vld [vmem:[#allocation7 + $0x34] sm:$0xf]
    %v530 = vld [vmem:[#allocation7 + $0x38] sm:$0xf]
    %v531 = vld [vmem:[#allocation7 + $0x3c] sm:$0xf]
    %v532 = vld [vmem:[#allocation7 + $0x40] sm:$0xf]
    %v533 = vld [vmem:[#allocation7 + $0x44] sm:$0xf]
    %v534 = vld [vmem:[#allocation7 + $0x48] sm:$0xf]
    %v535 = vld [vmem:[#allocation7 + $0x4c] sm:$0xf]
    %v536 = vld [vmem:[#allocation7 + $0x50] sm:$0xf]
    %v537 = vld [vmem:[#allocation7 + $0x54] sm:$0xf]
    %v538 = vld [vmem:[#allocation7 + $0x58] sm:$0xf]
    %v539 = vld [vmem:[#allocation7 + $0x5c] sm:$0xf]
    %v540 = vld [vmem:[#allocation7 + $0x60] sm:$0xf]
    %v541 = vld [vmem:[#allocation7 + $0x64] sm:$0xf]
    %v542 = vld [vmem:[#allocation7 + $0x68] sm:$0xf]
    %v543 = vld [vmem:[#allocation7 + $0x6c] sm:$0xf]
    %v544 = vld [vmem:[#allocation7 + $0x70] sm:$0xf]
    %v545 = vld [vmem:[#allocation7 + $0x74] sm:$0xf]
    %v546 = vld [vmem:[#allocation7 + $0x78] sm:$0xf]
    %v547 = vld [vmem:[#allocation7 + $0x7c] sm:$0xf]
    %v548 = vld [vmem:[#allocation7 + $0x80] sm:$0xf]
    %v549 = vld [vmem:[#allocation7 + $0x84] sm:$0xf]
    %v550 = vld [vmem:[#allocation7 + $0x88] sm:$0xf]
    %v551 = vld [vmem:[#allocation7 + $0x8c] sm:$0xf]
    %v552 = vld [vmem:[#allocation7 + $0x90] sm:$0xf]
    %v553 = vld [vmem:[#allocation7 + $0x94] sm:$0xf]
    %v554 = vld [vmem:[#allocation7 + $0x98] sm:$0xf]
    %v555 = vld [vmem:[#allocation7 + $0x9c] sm:$0xf]
    %v556 = vld [vmem:[#allocation7 + $0xa0] sm:$0xf]
    %v557 = vld [vmem:[#allocation7 + $0xa4] sm:$0xf]
    %v558 = vld [vmem:[#allocation7 + $0xa8] sm:$0xf]
    %v559 = vld [vmem:[#allocation7 + $0xac] sm:$0xf]
    %v560 = vld [vmem:[#allocation7 + $0xb0] sm:$0xf]
    %v561 = vld [vmem:[#allocation7 + $0xb4] sm:$0xf]
    %v562 = vld [vmem:[#allocation7 + $0xb8] sm:$0xf]
    %v563 = vld [vmem:[#allocation7 + $0xbc] sm:$0xf]
    %v612 = vunpack.c.l.b16 %v516
    %v613 = vunpack.c.l.b16 %v517
    %v614 = vunpack.c.l.b16 %v518
    %v615 = vunpack.c.l.b16 %v519
    %v616 = vunpack.c.l.b16 %v520
    %v617 = vunpack.c.l.b16 %v521
    %v618 = vunpack.c.l.b16 %v522
    %v619 = vunpack.c.l.b16 %v523
    %v620 = vunpack.c.l.b16 %v524
    %v621 = vunpack.c.l.b16 %v525
    %v622 = vunpack.c.l.b16 %v526
    %v623 = vunpack.c.l.b16 %v527
    %v624 = vunpack.c.l.b16 %v528
    %v625 = vunpack.c.l.b16 %v529
    %v626 = vunpack.c.l.b16 %v530
    %v627 = vunpack.c.l.b16 %v531
    %v628 = vunpack.c.l.b16 %v532
    %v629 = vunpack.c.l.b16 %v533
    %v630 = vunpack.c.l.b16 %v534
    %v631 = vunpack.c.l.b16 %v535
    %v632 = vunpack.c.l.b16 %v536
    %v633 = vunpack.c.l.b16 %v537
    %v634 = vunpack.c.l.b16 %v538
    %v635 = vunpack.c.l.b16 %v539
    %v636 = vunpack.c.l.b16 %v540
    %v637 = vunpack.c.l.b16 %v541
    %v638 = vunpack.c.l.b16 %v542
    %v639 = vunpack.c.l.b16 %v543
    %v640 = vunpack.c.l.b16 %v544
    %v641 = vunpack.c.l.b16 %v545
    %v642 = vunpack.c.l.b16 %v546
    %v643 = vunpack.c.l.b16 %v547
    %v644 = vunpack.c.l.b16 %v548
    %v645 = vunpack.c.l.b16 %v549
    %v646 = vunpack.c.l.b16 %v550
    %v647 = vunpack.c.l.b16 %v551
    %v648 = vunpack.c.l.b16 %v552
    %v649 = vunpack.c.l.b16 %v553
    %v650 = vunpack.c.l.b16 %v554
    %v651 = vunpack.c.l.b16 %v555
    %v652 = vunpack.c.l.b16 %v556
    %v653 = vunpack.c.l.b16 %v557
    %v654 = vunpack.c.l.b16 %v558
    %v655 = vunpack.c.l.b16 %v559
    %v656 = vunpack.c.l.b16 %v560
    %v657 = vunpack.c.l.b16 %v561
    %v658 = vunpack.c.l.b16 %v562
    %v659 = vunpack.c.l.b16 %v563
    %v660 = vpack.c.b16 %v613, %v612
    %v661 = vpack.c.b16 %v615, %v614
    %v662 = vpack.c.b16 %v617, %v616
    %v663 = vpack.c.b16 %v619, %v618
    %v664 = vpack.c.b16 %v621, %v620
    %v665 = vpack.c.b16 %v623, %v622
    %v666 = vpack.c.b16 %v625, %v624
    %v667 = vpack.c.b16 %v627, %v626
    %v668 = vpack.c.b16 %v629, %v628
    %v669 = vpack.c.b16 %v631, %v630
    %v670 = vpack.c.b16 %v633, %v632
    %v671 = vpack.c.b16 %v635, %v634
    %v672 = vpack.c.b16 %v637, %v636
    %v673 = vpack.c.b16 %v639, %v638
    %v674 = vpack.c.b16 %v641, %v640
    %v675 = vpack.c.b16 %v643, %v642
    %v676 = vpack.c.b16 %v645, %v644
    %v677 = vpack.c.b16 %v647, %v646
    %v678 = vpack.c.b16 %v649, %v648
    %v679 = vpack.c.b16 %v651, %v650
    %v680 = vpack.c.b16 %v653, %v652
    %v681 = vpack.c.b16 %v655, %v654
    %v682 = vpack.c.b16 %v657, %v656
    %v683 = vpack.c.b16 %v659, %v658
    %708 = vmatprep.subr.bf16.mxu0 0
    %709 = vmatpush1.bf16.msra.mxu0 %v660
    %710 = vmatprep.subr.bf16.mxu0 0
    %711 = vmatpush1.bf16.msra.mxu0 %v661
    %712 = vmatprep.subr.bf16.mxu0 0
    %713 = vmatpush1.bf16.msra.mxu0 %v662
    %714 = vmatprep.subr.bf16.mxu0 0
    %715 = vmatpush1.bf16.msra.mxu0 %v663
    %716 = vmatprep.subr.bf16.mxu0 0
    %717 = vmatpush1.bf16.msra.mxu0 %v664
    %718 = vmatprep.subr.bf16.mxu0 0
    %719 = vmatpush1.bf16.msra.mxu0 %v665
    %720 = vmatprep.subr.bf16.mxu0 0
    %721 = vmatpush1.bf16.msra.mxu0 %v666
    %722 = vmatprep.subr.bf16.mxu0 0
    %723 = vmatpush1.bf16.msra.mxu0 %v667
    %724 = vmatprep.subr.bf16.mxu0 0
    %725 = vmatpush1.bf16.msra.mxu0 %v668
    %726 = vmatprep.subr.bf16.mxu0 0
    %727 = vmatpush1.bf16.msra.mxu0 %v669
    %728 = vmatprep.subr.bf16.mxu0 0
    %729 = vmatpush1.bf16.msra.mxu0 %v670
    %730 = vmatprep.subr.bf16.mxu0 0
    %731 = vmatpush1.bf16.msra.mxu0 %v671
    %732 = vmatprep.subr.bf16.mxu0 0
    %733 = vmatpush1.bf16.msra.mxu0 %v672
    %734 = vmatprep.subr.bf16.mxu0 0
    %735 = vmatpush1.bf16.msra.mxu0 %v673
    %736 = vmatprep.subr.bf16.mxu0 0
    %737 = vmatpush1.bf16.msra.mxu0 %v674
    %738 = vmatprep.subr.bf16.mxu0 0
    %739 = vmatpush1.bf16.msra.mxu0 %v675
    %740 = vmatprep.mubr.bf16.mxu0 %v511
    %741 = vmatmul.mubr.bf16.gmra.mrb[0].mxu0 %v510
    %v742 = vpop.f32.mrb[0].mxu0
    %v743 = vadd.f32 0.0, %v742
    %v744 = vpop.f32.mrb[0].mxu0
    %v745 = vpop.f32.mrb[0].mxu0
    %v746 = vadd.f32 0.0, %v745
    %v747 = vpop.f32.mrb[0].mxu0
    %748 = vmatprep.mubr.bf16.mxu0 %v514
    %749 = vmatmul.mubr.bf16.gmra.mrb[0].mxu0 %v513
    %v750 = vpop.f32.mrb[0].mxu0
    %v751 = vadd.f32 0.0, %v750
    %v752 = vpop.f32.mrb[0].mxu0
    %v753 = vpop.f32.mrb[0].mxu0
    %v754 = vadd.f32 0.0, %v753
    %v755 = vpop.f32.mrb[0].mxu0
    %756 = vdwg.mxu0
    %757 = vmatprep.subr.bf16.mxu0 0
    %758 = vmatpush1.bf16.msra.mxu0 %v676
    %759 = vmatprep.subr.bf16.mxu0 0
    %760 = vmatpush1.bf16.msra.mxu0 %v677
    %761 = vmatprep.subr.bf16.mxu0 0
    %762 = vmatpush1.bf16.msra.mxu0 %v678
    %763 = vmatprep.subr.bf16.mxu0 0
    %764 = vmatpush1.bf16.msra.mxu0 %v679
    %765 = vmatprep.subr.bf16.mxu0 0
    %766 = vmatpush1.bf16.msra.mxu0 %v680
    %767 = vmatprep.subr.bf16.mxu0 0
    %768 = vmatpush1.bf16.msra.mxu0 %v681
    %769 = vmatprep.subr.bf16.mxu0 0
    %770 = vmatpush1.bf16.msra.mxu0 %v682
    %771 = vmatprep.subr.bf16.mxu0 0
    %772 = vmatpush1.bf16.msra.mxu0 %v683
    %773 = vmatprep.subr.bf16.mxu0 0
    %774 = vmatpush1.bf16.msra.mxu0 0
    %775 = vmatprep.subr.bf16.mxu0 0
    %776 = vmatpush1.bf16.msra.mxu0 0
    %777 = vmatprep.subr.bf16.mxu0 0
    %778 = vmatpush1.bf16.msra.mxu0 0
    %779 = vmatprep.subr.bf16.mxu0 0
    %780 = vmatpush1.bf16.msra.mxu0 0
    %781 = vmatprep.subr.bf16.mxu0 0
    %782 = vmatpush1.bf16.msra.mxu0 0
    %783 = vmatprep.subr.bf16.mxu0 0
    %784 = vmatpush1.bf16.msra.mxu0 0
    %785 = vmatprep.subr.bf16.mxu0 0
    %786 = vmatpush1.bf16.msra.mxu0 0
    %787 = vmatprep.subr.bf16.mxu0 0
    %788 = vmatpush1.bf16.msra.mxu0 0
    %789 = vmatprep.mubr.bf16.mxu0 0
    %790 = vmatmul.mubr.bf16.gmra.mrb[0].mxu0 %v512
    %v791 = vpop.f32.mrb[0].mxu0
    %v792 = vadd.f32 %v743, %v791
    %v793 = vpop.f32.mrb[0].mxu0
    %v794 = vpop.f32.mrb[0].mxu0
    %v795 = vadd.f32 %v746, %v794
    %v796 = vpop.f32.mrb[0].mxu0
    %797 = vmatprep.mubr.bf16.mxu0 0
    %798 = vmatmul.mubr.bf16.gmra.mrb[0].mxu0 %v515
    %v799 = vpop.f32.mrb[0].mxu0
    %v800 = vadd.f32 %v751, %v799
    %v801 = vpop.f32.mrb[0].mxu0
    %v802 = vpop.f32.mrb[0].mxu0
    %v803 = vadd.f32 %v754, %v802
    %v804 = vpop.f32.mrb[0].mxu0
    %805 = vdwg.mxu0
    %v806 = vld [vmem:[%s5] sm:$0x1]
    %v808 = vlaneseq
    %v809 = vshrl.u32 %v808, 7
    %v810 = vsub.s32 0, %v809
    %v811 = vrot.slane %v806, %v810
    %v813 = vmul.f32 %v792, %v811
    %v814 = vmul.f32 %v795, %v811
    %v815 = vmul.f32 %v800, %v811
    %v816 = vmul.f32 %v803, %v811
    %v817 = vld [vmem:[%s6] sm:$0x1]
    %v819 = vlaneseq
    %v820 = vshrl.u32 %v819, 7
    %v821 = vsub.s32 0, %v820
    %v822 = vrot.slane %v817, %v821
    %v824 = vadd.f32 %v813, %v822
    %v825 = vadd.f32 %v814, %v822
    %v826 = vadd.f32 %v815, %v822
    %v827 = vadd.f32 %v816, %v822
    %v828 = vadd.f32 %v824, %v134
    %v829 = vadd.f32 %v825, %v135
    %v830 = vadd.f32 %v826, %v136
    %v831 = vadd.f32 %v827, %v137
    %v832 = vmax.f32 %v828, 0.0
    %v833 = vmax.f32 %v829, 0.0
    %v834 = vmax.f32 %v830, 0.0
    %v835 = vmax.f32 %v831, 0.0
    %v836 = vpack.c.bf16 %v833, %v832
    %v837 = vpack.c.bf16 %v835, %v834
    %v840 = vunpack.c.l.b16 %v836
    %v841 = vunpack.c.h.b16 %v836
    %v842 = vunpack.c.l.b16 %v837
    %v843 = vunpack.c.h.b16 %v837
    %v844 = vpack.c.b16 %v840, %v840
    %v845 = vpack.c.b16 %v841, %v841
    %v846 = vpack.c.b16 %v842, %v842
    %v847 = vpack.c.b16 %v843, %v843
    %852 = vst [vmem:[#allocation8] sm:$0xf] %v844
    %853 = vst [vmem:[#allocation8 + $0x4] sm:$0xf] %v845
    %854 = vst [vmem:[#allocation8 + $0x8] sm:$0xf] %v846
    %855 = vst [vmem:[#allocation8 + $0xc] sm:$0xf] %v847
    // Predicated region
    $region42: #{tpu_custom_call.1} parent=1 // pred_check
      _
    $region43: #{tpu_custom_call.1} parent=1 // pred_check_branch
      %857 = sbr.rel (0) target = $region45
    $region44: #{tpu_custom_call.1} parent=1 // pred_region
      %s859 = ssub.s32 256, 256
      %860 = vsyncadd [#allocation4], %s859
      %s861 = sshll.u32 [#allocation8], 4
      %s862 = int_to_ptr.vmem [resolvable:$true] %s861
      %867 = dma.vmem_to_hbm [thread:$0]  %s862, 256, %s7, [#allocation4], 64, 64, 4
    $region45: #{tpu_custom_call.1} parent=1 // pred_fallthru
      _
    // Predicated region
    $region46: #{tpu_custom_call.1} parent=1 // pred_check
      _
    $region47: #{tpu_custom_call.1} parent=1 // pred_check_branch
      %869 = sbr.rel (0) target = $region49
    $region48: #{tpu_custom_call.1} parent=1 // pred_region
      %870 = dma.done [#allocation4], 256
    $region49: #{tpu_custom_call.1} parent=1 // pred_fallthru
      _
    %871 = vsyncpa [#allocation3], 1
    %872 = vsyncpa [#allocation6], 1
    %873 = vsyncpa [#allocation4], 1

</llo_original>
